<compile_context>
chip_gen: v7x
topology: tpu7x:2x2x1
jax: 0.10.0
libtpu: 0.0.40
codegen_flags: <defaults>
</compile_context>

<pallas_src>
import jax
import jax.numpy as jnp
from jax.experimental import pallas as pl
from jax.experimental.pallas import tpu as pltpu


# ----------------------------- Pallas kernel ------------------------------ #
def _pair_mm_lrelu_kernel(p_ref, w_ref, b_ref, o_ref):
    # p_ref: (TM, 72)   bf16 de-duplicated patch rows (2 conv outputs / row)
    # w_ref: (72, 128)  bf16 block-banded conv weights (VMEM resident)
    # b_ref: (1, 128)   f32 bias, tiled twice (VMEM resident)
    # o_ref: (TM, 128)  bf16 (default) -> 128-lane, fully contiguous stores
    acc = jnp.dot(p_ref[...], w_ref[...], preferred_element_type=jnp.float32)
    acc = acc + b_ref[...]
    # LeakyReLU(0.2) epilogue kept in f32 on the VPU (v5e-safe).
    o_ref[...] = jnp.where(acc > 0, acc, 0.2 * acc).astype(o_ref.dtype)


def _pair_matmul_lrelu(patches, w72, bias2, tile_rows, out_dtype):
    mp, kf = patches.shape
    _, c2 = w72.shape
    grid = (pl.cdiv(mp, tile_rows),)   # ragged last block: masked writes

    cost = pl.CostEstimate(
        flops=2 * mp * kf * c2,
        transcendentals=0,
        bytes_accessed=(
            patches.size * patches.dtype.itemsize      # streamed patch tiles
            + w72.size * w72.dtype.itemsize            # resident weights
            + bias2.size * 4                           # resident bias
            + mp * c2 * jnp.dtype(out_dtype).itemsize  # output
        ),
    )

    return pl.pallas_call(
        _pair_mm_lrelu_kernel,
        out_shape=jax.ShapeDtypeStruct((mp, c2), out_dtype),
        grid_spec=pltpu.PrefetchScalarGridSpec(
            num_scalar_prefetch=0,
            grid=grid,
            in_specs=[
                pl.BlockSpec((tile_rows, kf), lambda i: (i, 0)),  # streamed
                pl.BlockSpec((kf, c2), lambda i: (0, 0)),         # resident
                pl.BlockSpec((1, c2), lambda i: (0, 0)),          # resident
            ],
            out_specs=pl.BlockSpec((tile_rows, c2), lambda i: (i, 0)),
        ),
        compiler_params=pltpu.CompilerParams(
            # Pure output-parallel axis: megacore sharding on v7x, harmless
            # no-op on v5e/v6e.
            dimension_semantics=("parallel",),
        ),
        cost_estimate=cost,
    )(patches, w72, bias2)


def _pick_tile_rows(mp):
    """Pair-rows per grid step: multiple of 8, <= 8192, and >= 2 grid steps
    whenever the problem allows (so both v7x TensorCores get work)."""
    if mp <= 16:
        return mp                          # single block == full array dims
    half = ((mp + 1) // 2) // 8 * 8        # guarantees at least 2 steps
    return max(8, min(8192, half))


# ------------------------------ Wrapper ------------------------------------ #
def discriminator_forward(x, weight, bias, *, nhwc_output=True,
                          out_dtype=jnp.bfloat16):
    """DeblurGAN Discriminator forward: LeakyReLU(0.2)(Conv2d 3->64, k4 s2 p1).

    x: (N, 3, H, W) float32 (NCHW, as in the PyTorch module);
    weight: (64, 3, 4, 4); bias: (64,).
    Returns NHWC (N, Hout, Wout, 64) by default (skips the expensive layout
    transpose); pass nhwc_output=False for the module's NCHW layout.
    """
    N, Cin, H, W = x.shape
    Cout, _, KH, KW = weight.shape
    stride, pad = 2, 1
    Hout = (H + 2 * pad - KH) // stride + 1
    Wout = (W + 2 * pad - KW) // stride + 1
    Wq = (Wout + 1) // 2               # output-pixel pairs per row (fold = 2)
    Mp = N * Hout * Wq                 # kernel rows (one per output pair)

    # ---- glue: de-duplicated "pair" patches, bf16, NHWC ------------------- #
    # Row (n, oh, wp) holds the 4(h) x 6(w) x Cin input window shared by the
    # output pixels (oh, 2wp) and (oh, 2wp+1); feature order is (kw, kh, c)
    # with kw in 0..5 so pixel 2wp uses features [0:48] and pixel 2wp+1 uses
    # features [24:72] (the 24 shared values are stored once).
    rows_needed = 2 * Hout + 2
    cols_needed = 4 * Wq + 2
    x_nhwc = jnp.transpose(x, (0, 2, 3, 1)).astype(jnp.bfloat16)
    x_pad = jnp.pad(
        x_nhwc,
        ((0, 0), (1, rows_needed - H - 1), (1, cols_needed - W - 1), (0, 0)),
    )
    feats = []
    for dw in range(6):
        for dh in range(KH):
            feats.append(
                x_pad[:, dh:dh + 2 * Hout:2, dw:dw + 4 * Wq:4, :]
            )  # (N, Hout, Wq, Cin)
    kfold = 6 * KH * Cin                                     # 72
    patches = jnp.concatenate(feats, axis=-1).reshape(Mp, kfold)

    # ---- weights: block-banded (72, 128) so one matmul row emits 2 pixels - #
    # w_mat[(kw, kh, c), co] = weight[co, c, kh, kw]
    kfull = KH * KW * Cin                                    # 48
    w_mat = jnp.transpose(weight, (3, 2, 1, 0)).reshape(kfull, Cout)
    w_mat = w_mat.astype(jnp.bfloat16)
    w72 = jnp.zeros((kfold, 2 * Cout), jnp.bfloat16)
    w72 = w72.at[0:kfull, 0:Cout].set(w_mat)                 # pixel 2wp
    w72 = w72.at[kfold - kfull:, Cout:].set(w_mat)           # pixel 2wp + 1
    bias2 = jnp.concatenate([bias, bias]).astype(jnp.float32)
    bias2 = bias2.reshape(1, 2 * Cout)

    tile_rows = _pick_tile_rows(Mp)
    out2 = _pair_matmul_lrelu(patches, w72, bias2, tile_rows, out_dtype)

    # (Mp, 128) row-major == (N, Hout, 2*Wq, 64) NHWC row-major: free reshape.
    out_nhwc = out2.reshape(N, Hout, 2 * Wq, Cout)
    if 2 * Wq != Wout:                 # odd Wout: drop the padded fake column
        out_nhwc = out_nhwc[:, :, :Wout, :]
    if nhwc_output:
        return out_nhwc
    # Optional NCHW layout to match the PyTorch module exactly.
    return jnp.transpose(out_nhwc, (0, 3, 1, 2))


# ------------------------------ Reference ---------------------------------- #
def _reference_forward(x, weight, bias):
    out = jax.lax.conv_general_dilated(
        x, weight,
        window_strides=(2, 2),
        padding=((1, 1), (1, 1)),
        dimension_numbers=("NCHW", "OIHW", "NCHW"),
    ) + bias.reshape(1, -1, 1, 1)
    return jnp.where(out > 0, out, 0.2 * out)


if __name__ == "__main__":
    key = jax.random.PRNGKey(0)
    kx, kw, kb = jax.random.split(key, 3)

    # Small deterministic example consistent with the module: N=2, Cin=3, 16x16
    x = jax.random.normal(kx, (2, 3, 16, 16), dtype=jnp.float32)
    weight = 0.05 * jax.random.normal(kw, (64, 3, 4, 4), dtype=jnp.float32)
    bias = 0.01 * jax.random.normal(kb, (64,), dtype=jnp.float32)

    fwd = jax.jit(discriminator_forward)          # default: NHWC, bf16 output
    out = jax.block_until_ready(fwd(x, weight, bias))
    assert out.shape == (2, 8, 8, 64), out.shape

    ref_nhwc = _reference_forward(x, weight, bias).transpose(0, 2, 3, 1)
    # bf16 patch stream + bf16 output with f32 accumulation -> loose tolerance.
    assert jnp.allclose(out.astype(jnp.float32), ref_nhwc,
                        atol=3e-2, rtol=3e-2), "mismatch vs reference"

    print("KERNEL_OK")
</pallas_src>

<mosaic_0001>
module attributes {stable_mosaic.version = 11 : i64} {
  func.func @_pair_mm_lrelu_kernel(%arg0: i32, %arg1: memref<32x72xbf16, #tpu.memory_space<vmem>>, %arg2: memref<72x128xbf16, #tpu.memory_space<vmem>>, %arg3: memref<1x128xf32, #tpu.memory_space<vmem>>, %arg4: memref<32x128xbf16, #tpu.memory_space<vmem>>) attributes {dimension_semantics = [#tpu.dimension_semantics<parallel>], iteration_bounds = array<i64: 2>, scalar_prefetch = 0 : i64, scratch_operands = 0 : i64, tpu.core_type = #tpu.core_type<tc>, window_params = [{transform_indices = @transform_0, window_bounds = array<i64: 32, 72>}, {pipeline_mode = #tpu.pipeline_mode<synchronous>, transform_indices = @transform_1, window_bounds = array<i64: 72, 128>}, {pipeline_mode = #tpu.pipeline_mode<synchronous>, transform_indices = @transform_2, window_bounds = array<i64: 1, 128>}, {transform_indices = @transform_3, window_bounds = array<i64: 32, 128>}]} {
    %c0 = arith.constant 0 : index
    %c0_0 = arith.constant 0 : index
    %0 = vector.load %arg1[%c0, %c0_0] : memref<32x72xbf16, #tpu.memory_space<vmem>>, vector<32x72xbf16>
    %c0_1 = arith.constant 0 : index
    %c0_2 = arith.constant 0 : index
    %1 = vector.load %arg2[%c0_1, %c0_2] : memref<72x128xbf16, #tpu.memory_space<vmem>>, vector<72x128xbf16>
    %cst = arith.constant dense<0.000000e+00> : vector<32x128xf32>
    %2 = tpu.matmul %0, %1, %cst {dimension_numbers = #tpu.dot_dimension_numbers<[1], [0], [0], [1], [0, 0, 1, 1], [], []>} : vector<32x72xbf16>, vector<72x128xbf16>, vector<32x128xf32> -> vector<32x128xf32>
    %c0_3 = arith.constant 0 : index
    %c0_4 = arith.constant 0 : index
    %3 = vector.load %arg3[%c0_3, %c0_4] : memref<1x128xf32, #tpu.memory_space<vmem>>, vector<1x128xf32>
    %4 = vector.broadcast %3 : vector<1x128xf32> to vector<32x128xf32>
    %5 = arith.addf %2, %4 : vector<32x128xf32>
    %cst_5 = arith.constant 0.000000e+00 : f32
    %6 = vector.broadcast %cst_5 : f32 to vector<32x128xf32>
    %7 = arith.cmpf ogt, %5, %6 : vector<32x128xf32>
    %cst_6 = arith.constant 2.000000e-01 : f32
    %8 = vector.broadcast %cst_6 : f32 to vector<32x128xf32>
    %9 = arith.mulf %8, %5 : vector<32x128xf32>
    %10 = arith.select %7, %5, %9 : vector<32x128xi1>, vector<32x128xf32>
    %11 = arith.truncf %10 : vector<32x128xf32> to vector<32x128xbf16>
    %c0_7 = arith.constant 0 : index
    %c0_8 = arith.constant 0 : index
    %12 = vector.load %arg4[%c0_7, %c0_8] : memref<32x128xbf16, #tpu.memory_space<vmem>>, vector<32x128xbf16>
    tpu.vector_store %arg4[%c0_7, %c0_8], %11 {strides = array<i32>} : memref<32x128xbf16, #tpu.memory_space<vmem>>, vector<32x128xbf16>,
    return
  }
  func.func @transform_0(%arg0: i32) -> (i32, i32) {
    %c0_i32 = arith.constant 0 : i32
    %c0_i32_0 = arith.constant 0 : i32
    return %arg0, %c0_i32 : i32, i32
  }
  func.func @transform_1(%arg0: i32) -> (i32, i32) {
    %c0_i32 = arith.constant 0 : i32
    %c0_i32_0 = arith.constant 0 : i32
    %c0_i32_1 = arith.constant 0 : i32
    return %c0_i32, %c0_i32_0 : i32, i32
  }
  func.func @transform_2(%arg0: i32) -> (i32, i32) {
    %c0_i32 = arith.constant 0 : i32
    %c0_i32_0 = arith.constant 0 : i32
    %c0_i32_1 = arith.constant 0 : i32
    return %c0_i32, %c0_i32_0 : i32, i32
  }
  func.func @transform_3(%arg0: i32) -> (i32, i32) {
    %c0_i32 = arith.constant 0 : i32
    %c0_i32_0 = arith.constant 0 : i32
    return %arg0, %c0_i32 : i32, i32
  }
}

</mosaic_0001>

<llo_original>
// kernel: discriminator_forward.1
$region0: #{discriminator_forward.1}
  #allocation0 [shape = 'u32[]', space=smem, size = 0x4, offset = 0x4, fixed_abs, tag = 'smem constant byte address 0x4 - core index']
  #allocation1 [shape = 'u32[144,128]{1,0:T(1,128)}', space=vmem, size = 0x12000, scoped, tag = 'internal scratch']
  %s0 = inlined_call_operand.vmem [shape: bf16[64,72], index: 0, kind: input, shape index: {}]
  %s1 = inlined_call_operand.vmem [shape: bf16[72,128], index: 1, kind: input, shape index: {}]
  %s2 = inlined_call_operand.vmem [shape: f32[1,128], index: 2, kind: input, shape index: {}]
  %s3 = inlined_call_operand.vmem [shape: bf16[64,128], index: 3, kind: output, shape index: {}]
  %s4 = sld [smem:[#allocation0]]
  $region45: #{discriminator_forward.1} parent=0
    _
  %s6 = ssub.s32 1, %s4
  %s7 = scalar_select 0, %s6, %s4
  loop: start=0, step=1, limit=4
  $region2: #{discriminator_forward.1} parent=0 // loop_pre_header
    _
  $region3: #{discriminator_forward.1} parent=0 // loop_header
    %s9 = sphi 0, %s13
    %p10 = scmp.ge.s32.totalorder %s9, 4
    %s19 = sphi 0, %s21
    %s22 = sphi 0, %s19
    %s23 = sphi 0, %s22
    %s39 = sphi 0, %s23
    %s43 = sphi 0, %s43
    %s45 = sphi 0, %s43
    %s46 = sphi 0, %s45
    %s60 = sphi 0, %s46
    %s64 = sphi 0, %s64
    %s66 = sphi 0, %s64
    %s67 = sphi 0, %s66
    %s81 = sphi 0, %s67
    %s87 = sphi 0, %s89
    %s90 = sphi 0, %s87
    %s91 = sphi 0, %s90
    %s107 = sphi 0, %s91
  $region4: #{discriminator_forward.1} parent=0 // loop_header_branch
    %12 = sbr.rel (%p10) target = $region8
  $region5: #{discriminator_forward.1} parent=0 // loop_body
    %s14 = ssub.s32 %s9, 1
    %s15 = ssub.s32 %s9, 2
    %s16 = sadd.s32 %s9, 1
    %s17 = ssub.s32 %s9, %s16
    %p18 = scmp.eq.s32.totalorder %s17, 0
    %s20 = sadd.s32 %s19, 1
    %s21 = scalar_select %p18, %s19, %s20
    %p24 = pneg %p18
    %p25 = scmp.eq.s32.totalorder %s9, 1
    %p26 = por %p24, %p25
    %p27 = scmp.ne.s32.totalorder %s19, %s22
    %p28 = scmp.eq.s32.totalorder %s9, 0
    %p29 = por %p27, %p28
    %p30 = scmp.ne.s32.totalorder %s19, %s22
    %p31 = scmp.eq.s32.totalorder %s14, 1
    %p32 = por %p30, %p31
    %p33 = scmp.ne.s32.totalorder %s22, %s23
    %p34 = scmp.eq.s32.totalorder %s14, 0
    %p35 = por %p33, %p34
    %p36 = scmp.ne.s32.totalorder %s22, %s23
    %p37 = scmp.eq.s32.totalorder %s15, 1
    %p38 = por %p36, %p37
    %p40 = scmp.ne.s32.totalorder %s23, %s39
    %p41 = scmp.eq.s32.totalorder %s15, 0
    %p42 = por %p40, %p41
    %s44 = sadd.s32 %s43, 1
    %p47 = scmp.eq.s32.totalorder %s9, 1
    %p48 = scmp.ne.s32.totalorder %s43, %s45
    %p49 = scmp.eq.s32.totalorder %s9, 0
    %p50 = por %p48, %p49
    %p51 = scmp.ne.s32.totalorder %s43, %s45
    %p52 = scmp.eq.s32.totalorder %s14, 1
    %p53 = por %p51, %p52
    %p54 = scmp.ne.s32.totalorder %s45, %s46
    %p55 = scmp.eq.s32.totalorder %s14, 0
    %p56 = por %p54, %p55
    %p57 = scmp.ne.s32.totalorder %s45, %s46
    %p58 = scmp.eq.s32.totalorder %s15, 1
    %p59 = por %p57, %p58
    %p61 = scmp.ne.s32.totalorder %s46, %s60
    %p62 = scmp.eq.s32.totalorder %s15, 0
    %p63 = por %p61, %p62
    %s65 = sadd.s32 %s64, 1
    %p68 = scmp.eq.s32.totalorder %s9, 1
    %p69 = scmp.ne.s32.totalorder %s64, %s66
    %p70 = scmp.eq.s32.totalorder %s9, 0
    %p71 = por %p69, %p70
    %p72 = scmp.ne.s32.totalorder %s64, %s66
    %p73 = scmp.eq.s32.totalorder %s14, 1
    %p74 = por %p72, %p73
    %p75 = scmp.ne.s32.totalorder %s66, %s67
    %p76 = scmp.eq.s32.totalorder %s14, 0
    %p77 = por %p75, %p76
    %p78 = scmp.ne.s32.totalorder %s66, %s67
    %p79 = scmp.eq.s32.totalorder %s15, 1
    %p80 = por %p78, %p79
    %p82 = scmp.ne.s32.totalorder %s67, %s81
    %p83 = scmp.eq.s32.totalorder %s15, 0
    %p84 = por %p82, %p83
    %s85 = ssub.s32 %s9, %s16
    %p86 = scmp.eq.s32.totalorder %s85, 0
    %s88 = sadd.s32 %s87, 1
    %s89 = scalar_select %p86, %s87, %s88
    %p92 = pneg %p86
    %p93 = scmp.eq.s32.totalorder %s9, 1
    %p94 = por %p92, %p93
    %p95 = scmp.ne.s32.totalorder %s87, %s90
    %p96 = scmp.eq.s32.totalorder %s9, 0
    %p97 = por %p95, %p96
    %p98 = scmp.ne.s32.totalorder %s87, %s90
    %p99 = scmp.eq.s32.totalorder %s14, 1
    %p100 = por %p98, %p99
    %p101 = scmp.ne.s32.totalorder %s90, %s91
    %p102 = scmp.eq.s32.totalorder %s14, 0
    %p103 = por %p101, %p102
    %p104 = scmp.ne.s32.totalorder %s90, %s91
    %p105 = scmp.eq.s32.totalorder %s15, 1
    %p106 = por %p104, %p105
    %p108 = scmp.ne.s32.totalorder %s91, %s107
    %p109 = scmp.eq.s32.totalorder %s15, 0
    %p110 = por %p108, %p109
    %p111 = scmp.le.s32.totalorder 1, %s9
    %p112 = scmp.lt.s32.totalorder %s9, 3
    %p113 = pnand %p111, %p112
    %p114 = pneg %p113
    // Predicated region
    $region9: #{discriminator_forward.1} parent=5 // pred_check
      _
    $region10: #{discriminator_forward.1} parent=5 // pred_check_branch
      %116 = sbr.rel (%p113) target = $region12
    $region11: #{discriminator_forward.1} parent=5 // pred_region
      %s117 = ssub.s32 %s9, 1
      // Predicated region
      $region13: #{discriminator_forward.1} parent=11 // pred_check
        %p118 = pneg %p56
      $region14: #{discriminator_forward.1} parent=11 // pred_check_branch
        %120 = sbr.rel (%p118) target = $region16
      $region15: #{discriminator_forward.1} parent=11 // pred_region
        _
      $region16: #{discriminator_forward.1} parent=11 // pred_fallthru
        _
      // Predicated region
      $region17: #{discriminator_forward.1} parent=11 // pred_check
        %p121 = pneg %p77
      $region18: #{discriminator_forward.1} parent=11 // pred_check_branch
        %123 = sbr.rel (%p121) target = $region20
      $region19: #{discriminator_forward.1} parent=11 // pred_region
        _
      $region20: #{discriminator_forward.1} parent=11 // pred_fallthru
        _
    $region12: #{discriminator_forward.1} parent=5 // pred_fallthru
      _
    %p124 = scmp.lt.s32.totalorder %s9, 2
    // Predicated region
    $region21: #{discriminator_forward.1} parent=5 // pred_check
      %p125 = pneg %p124
    $region22: #{discriminator_forward.1} parent=5 // pred_check_branch
      %127 = sbr.rel (%p125) target = $region24
    $region23: #{discriminator_forward.1} parent=5 // pred_region
      // Predicated region
      $region25: #{discriminator_forward.1} parent=23 // pred_check
        %p128 = pneg %p29
      $region26: #{discriminator_forward.1} parent=23 // pred_check_branch
        %130 = sbr.rel (%p128) target = $region28
      $region27: #{discriminator_forward.1} parent=23 // pred_region
        %s131 = smul.u32 4, %s9
        %p132 = scmp.lt.s32.totalorder %s131, 7
        %s133 = scalar_select %p132, %s131, 7
        %s134 = smul.addr %s133, 4
        %s135 = scalar_lea.vmem %s0, %s134
        %s136 = smul.u32 4, %s9
      $region28: #{discriminator_forward.1} parent=23 // pred_fallthru
        _
    $region24: #{discriminator_forward.1} parent=5 // pred_fallthru
      _
    %p137 = scmp.le.s32.totalorder 1, %s9
    %p138 = scmp.lt.s32.totalorder %s9, 3
    %p139 = pnand %p137, %p138
    %p140 = pneg %p139
    // Predicated region
    $region29: #{discriminator_forward.1} parent=5 // pred_check
      _
    $region30: #{discriminator_forward.1} parent=5 // pred_check_branch
      %142 = sbr.rel (%p139) target = $region32
    $region31: #{discriminator_forward.1} parent=5 // pred_region
      %s143 = ssub.s32 %s9, 1
      %s144 = smul.u32 4, %s14
      %p145 = scmp.lt.s32.totalorder %s144, 7
      %s146 = scalar_select %p145, %s144, 7
      %s147 = smul.addr %s146, 4
      %s148 = scalar_lea.vmem %s0, %s147
      %p149 = pneg %p35
      %p150 = pneg %p32
      %p151 = pneg %p56
      %p152 = pneg %p53
      %p153 = pneg %p77
      %p154 = pneg %p74
      %p155 = pneg %p103
      %p156 = pneg %p100
      %s157 = smul.u32 4, %s14
      %p158 = scmp.lt.s32.totalorder %s157, 7
      %s159 = scalar_select %p158, %s157, 7
      %s160 = smul.addr %s159, 4
      %s161 = scalar_lea.vmem %s3, %s160
      %s162 = smul.u32 4, %s14
      %p163 = scmp.lt.s32.totalorder %s162, 7
      %s164 = scalar_select %p163, %s162, 7
      %s165 = smul.addr %s164, 4
      %s166 = scalar_lea.vmem %s0, %s165
      %s167 = smul.u32 4, %s14
      %s168 = smul.u32 4, %s14
      %p169 = scmp.lt.s32.totalorder %s168, 7
      %s170 = scalar_select %p169, %s168, 7
      %s171 = smul.addr %s170, 4
      %s172 = scalar_lea.vmem %s3, %s171
      %s173 = smul.u32 4, %s14
      %v175 = vld [vmem:[%s166] sm:$0xf]
      %v176 = vld [vmem:[%s166 + $0x4] sm:$0xf]
      %v177 = vld [vmem:[%s166 + $0x8] sm:$0xf]
      %v178 = vld [vmem:[%s166 + $0xc] sm:$0xf]
      %v179 = vld [vmem:[%s1] sm:$0xf]
      %v180 = vld [vmem:[%s1 + $0x4] sm:$0xf]
      %v181 = vld [vmem:[%s1 + $0x8] sm:$0xf]
      %v182 = vld [vmem:[%s1 + $0xc] sm:$0xf]
      %v183 = vld [vmem:[%s1 + $0x10] sm:$0xf]
      %v184 = vld [vmem:[%s1 + $0x14] sm:$0xf]
      %v185 = vld [vmem:[%s1 + $0x18] sm:$0xf]
      %v186 = vld [vmem:[%s1 + $0x1c] sm:$0xf]
      %v187 = vld [vmem:[%s1 + $0x20] sm:$0xf]
      %v188 = vld [vmem:[%s2] sm:$0x1]
      %v190 = vlaneseq
      %v191 = vshrl.u32 %v190, 7
      %v192 = vsub.s32 0, %v191
      %v193 = vrot.slane %v188, %v192
      %v199 = vunpack.c.l.b16 %v175
      %v200 = vunpack.c.l.b16 %v176
      %v201 = vunpack.c.l.b16 %v177
      %v202 = vunpack.c.l.b16 %v178
      %v203 = vpack.c.b16 %v200, %v199
      %v204 = vpack.c.b16 %v202, %v201
      %v214 = vunpack.c.l.b16 %v179
      %v215 = vunpack.c.l.b16 %v180
      %v216 = vunpack.c.l.b16 %v181
      %v217 = vunpack.c.l.b16 %v182
      %v218 = vunpack.c.l.b16 %v183
      %v219 = vunpack.c.l.b16 %v184
      %v220 = vunpack.c.l.b16 %v185
      %v221 = vunpack.c.l.b16 %v186
      %v222 = vunpack.c.l.b16 %v187
      %v223 = vpack.c.b16 %v215, %v214
      %v224 = vpack.c.b16 %v217, %v216
      %v225 = vpack.c.b16 %v219, %v218
      %v226 = vpack.c.b16 %v221, %v220
      %v227 = vpack.c.b16 %v222, %v222
      %vm232 = vcmask 588800
      %v234 = vsel %vm232, %v203, 0
      %v237 = vsel %vm232, %v204, 0
      %vm239 = vcmask 1043456
      %v241 = vsel %vm239, %v227, 0
      %243 = vmatprep.subr.bf16.mxu0 0
      %244 = vmatpush1.bf16.msra.mxu0 %v223
      %245 = vmatprep.subr.bf16.mxu0 0
      %246 = vmatpush1.bf16.msra.mxu0 %v224
      %247 = vmatprep.subr.bf16.mxu0 0
      %248 = vmatpush1.bf16.msra.mxu0 %v225
      %249 = vmatprep.subr.bf16.mxu0 0
      %250 = vmatpush1.bf16.msra.mxu0 %v226
      %251 = vmatprep.subr.bf16.mxu0 0
      %252 = vmatpush1.bf16.msra.mxu0 %v241
      %253 = vmatprep.subr.bf16.mxu0 0
      %254 = vmatpush1.bf16.msra.mxu0 0
      %255 = vmatprep.subr.bf16.mxu0 0
      %256 = vmatpush1.bf16.msra.mxu0 0
      %257 = vmatprep.subr.bf16.mxu0 0
      %258 = vmatpush1.bf16.msra.mxu0 0
      %259 = vmatprep.subr.bf16.mxu0 0
      %260 = vmatpush1.bf16.msra.mxu0 0
      %261 = vmatprep.subr.bf16.mxu0 0
      %262 = vmatpush1.bf16.msra.mxu0 0
      %263 = vmatprep.subr.bf16.mxu0 0
      %264 = vmatpush1.bf16.msra.mxu0 0
      %265 = vmatprep.subr.bf16.mxu0 0
      %266 = vmatpush1.bf16.msra.mxu0 0
      %267 = vmatprep.subr.bf16.mxu0 0
      %268 = vmatpush1.bf16.msra.mxu0 0
      %269 = vmatprep.subr.bf16.mxu0 0
      %270 = vmatpush1.bf16.msra.mxu0 0
      %271 = vmatprep.subr.bf16.mxu0 0
      %272 = vmatpush1.bf16.msra.mxu0 0
      %273 = vmatprep.subr.bf16.mxu0 0
      %274 = vmatpush1.bf16.msra.mxu0 0
      %275 = vmatprep.mubr.bf16.mxu0 0
      %276 = vmatmul.mubr.bf16.gmra.mrb[0].mxu0 %v234
      %v277 = vpop.f32.mrb[0].mxu0
      %v278 = vadd.f32 %v193, %v277
      %v279 = vpop.f32.mrb[0].mxu0
      %v280 = vpop.f32.mrb[0].mxu0
      %v281 = vadd.f32 %v193, %v280
      %v282 = vpop.f32.mrb[0].mxu0
      %283 = vmatprep.mubr.bf16.mxu0 0
      %284 = vmatmul.mubr.bf16.gmra.mrb[0].mxu0 %v237
      %v285 = vpop.f32.mrb[0].mxu0
      %v286 = vadd.f32 %v193, %v285
      %v287 = vpop.f32.mrb[0].mxu0
      %v288 = vpop.f32.mrb[0].mxu0
      %v289 = vadd.f32 %v193, %v288
      %v290 = vpop.f32.mrb[0].mxu0
      %291 = vdwg.mxu0
      %vm292 = vcmp.gt.f32.partialorder %v278, 0.0
      %vm293 = vcmp.gt.f32.partialorder %v281, 0.0
      %vm294 = vcmp.gt.f32.partialorder %v286, 0.0
      %vm295 = vcmp.gt.f32.partialorder %v289, 0.0
      %v296 = vmul.f32 %v278, 0.2
      %v297 = vmul.f32 %v281, 0.2
      %v298 = vmul.f32 %v286, 0.2
      %v299 = vmul.f32 %v289, 0.2
      %v300 = vsel %vm292, %v278, %v296
      %v301 = vsel %vm293, %v281, %v297
      %v302 = vsel %vm294, %v286, %v298
      %v303 = vsel %vm295, %v289, %v299
      %v304 = vpack.c.bf16 %v301, %v300
      %v305 = vpack.c.bf16 %v303, %v302
      %v308 = vunpack.c.l.b16 %v304
      %v309 = vunpack.c.h.b16 %v304
      %v310 = vunpack.c.l.b16 %v305
      %v311 = vunpack.c.h.b16 %v305
      %v312 = vpack.c.b16 %v308, %v308
      %v313 = vpack.c.b16 %v309, %v309
      %v314 = vpack.c.b16 %v310, %v310
      %v315 = vpack.c.b16 %v311, %v311
      %320 = vst [vmem:[%s172] sm:$0xf] %v312
      %321 = vst [vmem:[%s172 + $0x4] sm:$0xf] %v313
      %322 = vst [vmem:[%s172 + $0x8] sm:$0xf] %v314
      %323 = vst [vmem:[%s172 + $0xc] sm:$0xf] %v315
      %s324 = smul.u32 4, %s14
      %p325 = scmp.lt.s32.totalorder %s324, 7
      %s326 = scalar_select %p325, %s324, 7
      %s327 = smul.addr %s326, 4
      %s328 = scalar_lea.vmem %s3, %s327
      // Predicated region
      $region33: #{discriminator_forward.1} parent=31 // pred_check
        %p329 = pneg %p100
      $region34: #{discriminator_forward.1} parent=31 // pred_check_branch
        %331 = sbr.rel (%p329) target = $region36
      $region35: #{discriminator_forward.1} parent=31 // pred_region
        %s332 = smul.u32 4, %s14
      $region36: #{discriminator_forward.1} parent=31 // pred_fallthru
        _
    $region32: #{discriminator_forward.1} parent=5 // pred_fallthru
      _
    %p333 = scmp.le.s32.totalorder 2, %s9
    // Predicated region
    $region37: #{discriminator_forward.1} parent=5 // pred_check
      %p334 = pneg %p333
    $region38: #{discriminator_forward.1} parent=5 // pred_check_branch
      %336 = sbr.rel (%p334) target = $region40
    $region39: #{discriminator_forward.1} parent=5 // pred_region
      %s337 = ssub.s32 %s9, 2
      // Predicated region
      $region41: #{discriminator_forward.1} parent=39 // pred_check
        %p338 = pneg %p106
      $region42: #{discriminator_forward.1} parent=39 // pred_check_branch
        %340 = sbr.rel (%p338) target = $region44
      $region43: #{discriminator_forward.1} parent=39 // pred_region
        %s341 = smul.u32 4, %s15
        %p342 = scmp.lt.s32.totalorder %s341, 7
        %s343 = scalar_select %p342, %s341, 7
        %s344 = smul.addr %s343, 4
        %s345 = scalar_lea.vmem %s3, %s344
      $region44: #{discriminator_forward.1} parent=39 // pred_fallthru
        _
    $region40: #{discriminator_forward.1} parent=5 // pred_fallthru
      _
  $region6: #{discriminator_forward.1} parent=0 // loop_footer
    %s13 = sadd.s32 1, %s9
  $region7: #{discriminator_forward.1} parent=0 // loop_footer_branch
    %8 = sbr.rel target = $region3
  $region8: #{discriminator_forward.1} parent=0 // loop_exit
    _

</llo_original>
